<compile_context>
chip_gen: v7x
topology: tpu7x:2x2x1
jax: 0.10.0
libtpu: 0.0.40
codegen_flags: <defaults>
</compile_context>

<pallas_src>
import functools

import jax
import jax.numpy as jnp
from jax import lax
from jax.experimental import pallas as pl
from jax.experimental.pallas import tpu as pltpu


# --------------------------------------------------------------------------- #
# Kernel
# --------------------------------------------------------------------------- #
def _temporal_block_kernel(x_ref, w1_ref, b1_ref, w2_ref, b2_ref, *rest,
                           K, dilation, padding, L_out, Bt, Cin, Cout,
                           has_downsample, residual_from_scratch):
    if has_downsample:
        wd_ref, bd_ref, out_ref, xps_ref, h1p_ref = rest
    else:
        out_ref, xps_ref, h1p_ref = rest
        wd_ref = bd_ref = None

    d = dilation
    NL = Bt * L_out                      # packed lane width (batch x time)
    mm = xps_ref.dtype

    # ---- stage x into the lane-packed, left-halo'd scratch ----------------
    # xps[:, padding + b*L + t] = x[b, :, t].  The left `padding` columns are
    # never written: every tap that would read them is masked below, so there
    # is no per-step zero-fill at all.  (One store per batch element; for
    # Bt == 1 — the L_out >= 128 regime — this is a single block store.)
    for b in range(Bt):
        xps_ref[:, padding + b * L_out: padding + (b + 1) * L_out] = (
            x_ref[b].astype(mm))

    # Column phase within each batch segment (causality mask for the taps).
    col = lax.broadcasted_iota(jnp.int32, (1, NL), 1)
    tmod = (col % L_out) if Bt > 1 else col

    def causal_conv(src_ref, w_ref):
        # K accumulating (Cout, C) x (C, NL) MXU dots, one per dilated tap.
        # Each tap reads ONE statically-offset lane slice of the padded
        # scratch — no concat-based im2col, no nested slice-of-concat copies.
        acc = None
        for k in range(K):
            s = (K - 1 - k) * d                          # causal left shift
            slab = src_ref[:, padding - s: padding - s + NL]
            if s > 0:
                slab = jnp.where(tmod >= s, slab, jnp.zeros_like(slab))
            contrib = jnp.dot(w_ref[k], slab,
                              preferred_element_type=jnp.float32)
            acc = contrib if acc is None else acc + contrib
        return acc

    # ---- conv1 -> chomp -> ReLU  (dropout1 = identity, eval mode) ----------
    # TODO(synk): dropout1/dropout2 are identity here (inference semantics).
    h1 = jnp.maximum(causal_conv(xps_ref, w1_ref) + b1_ref[...], 0.0)

    # ---- conv2 -> chomp -> ReLU --------------------------------------------
    h1p_ref[:, padding:] = h1.astype(mm)        # single lane-dense store
    h2 = jnp.maximum(causal_conv(h1p_ref, w2_ref) + b2_ref[...], 0.0)

    # ---- residual (identity or 1x1 downsample), kept in f32 ----------------
    if residual_from_scratch:
        res_src = xps_ref[:, padding:].astype(jnp.float32)   # packed x, f32
    else:
        # bf16 matmul path: keep the skip connection exact by re-reading x.
        if Bt == 1:
            res_src = x_ref[0].astype(jnp.float32)
        else:
            res_src = jnp.concatenate(
                [x_ref[b].astype(jnp.float32) for b in range(Bt)], axis=1)
    if has_downsample:
        res = jnp.dot(wd_ref[...], res_src,
                      preferred_element_type=jnp.float32) + bd_ref[...]
    else:
        res = res_src                                          # Cin == Cout

    out_ref[0] = jnp.maximum(h2 + res, 0.0).astype(out_ref.dtype)


# --------------------------------------------------------------------------- #
# Tiling heuristics
# --------------------------------------------------------------------------- #
_VMEM_TILE_BUDGET = 24 * 1024 * 1024   # ~half of v7x's 64 MiB physical VMEM


def _tile_vmem_bytes(Bt, Cin, Cout, L_out, padding, mm_itemsize):
    NL = Bt * L_out
    x_blk = 2 * Bt * Cin * L_out * 4        # double-buffered f32 input block
    out_blk = 2 * Cout * NL * 4             # double-buffered f32 output block
    scratch = (Cin + Cout) * (padding + NL) * mm_itemsize
    live = 4 * Cout * NL * 4                # f32 intermediates (acc/h1/h2/res)
    return x_blk + out_blk + scratch + live


def _pick_batch_tile(B, L_out, max_lanes=1024):
    """Pack Bt batch elements onto the lane axis of a (Cout, Bt*L_out) slab."""
    if L_out >= 128:
        return 1                      # time axis is already lane-dense
    divisors = [d for d in range(1, B + 1) if B % d == 0]
    cands = [d for d in divisors if d * L_out <= max_lanes] or [divisors[0]]
    dense = [d for d in cands if d * L_out >= 128]
    if dense:
        # prefer lane-dense tiles; among those keep >= 2 grid steps if we can
        # (v7x: 2 TensorCores), and aim for >= 512 packed lanes.
        pool = [d for d in dense if B // d >= 2] or dense
        for d in pool:
            if d * L_out >= 512:
                return d
        return pool[-1]
    # cannot reach 128 lanes at all: keep >= 2 grid steps, widest tile.
    pool = [d for d in cands if B // d >= 2] or cands
    return pool[-1]


# --------------------------------------------------------------------------- #
# Wrapper
# --------------------------------------------------------------------------- #
def temporal_block(x, w1, b1, w2, b2, wd, bd, *,
                   kernel_size, stride, dilation, padding,
                   use_bf16_matmul=False, batch_tile=None):
    """x: (B, Cin, L) float32. Conv weights in PyTorch layout (Cout, Cin, K)."""
    assert stride == 1, "TCN TemporalBlock is used with stride=1"
    B, Cin, L = x.shape
    Cout = w1.shape[0]
    K = kernel_size
    L_out = L + padding - dilation * (K - 1)
    assert L_out == L, "padding must equal dilation * (kernel_size - 1)"
    has_ds = wd is not None
    if not has_ds:
        assert Cin == Cout, "identity residual needs n_inputs == n_outputs"

    mm_dtype = jnp.bfloat16 if use_bf16_matmul else jnp.float32

    if batch_tile is None:
        batch_tile = _pick_batch_tile(B, L_out)
        itemsz = jnp.dtype(mm_dtype).itemsize
        while (batch_tile > 1 and
               _tile_vmem_bytes(batch_tile, Cin, Cout, L_out, padding, itemsz)
               > _VMEM_TILE_BUDGET):
            batch_tile = max(d for d in range(1, batch_tile) if B % d == 0)
    Bt = batch_tile
    assert B % Bt == 0
    n_tiles = B // Bt
    NL = Bt * L_out

    # ---- weight re-layout (tiny, wrapper side) -----------------------------
    # Taps on the leading axis so each per-tap (Cout, C) slice is a whole-tile
    # read inside the kernel.
    w1_t = jnp.transpose(w1, (2, 0, 1)).astype(mm_dtype)      # (K, Cout, Cin)
    w2_t = jnp.transpose(w2, (2, 0, 1)).astype(mm_dtype)      # (K, Cout, Cout)
    b1c = b1.reshape(Cout, 1).astype(jnp.float32)
    b2c = b2.reshape(Cout, 1).astype(jnp.float32)

    inputs = [x, w1_t, b1c, w2_t, b2c]        # x stays f32; cast in-kernel
    in_specs = [
        pl.BlockSpec((Bt, Cin, L), lambda g: (g, 0, 0)),
        pl.BlockSpec((K, Cout, Cin), lambda g: (0, 0, 0)),
        pl.BlockSpec((Cout, 1), lambda g: (0, 0)),
        pl.BlockSpec((K, Cout, Cout), lambda g: (0, 0, 0)),
        pl.BlockSpec((Cout, 1), lambda g: (0, 0)),
    ]
    if has_ds:
        wd2 = wd[:, :, 0].astype(jnp.float32)                 # skip stays f32
        bdc = bd.reshape(Cout, 1).astype(jnp.float32)
        inputs += [wd2, bdc]
        in_specs += [pl.BlockSpec((Cout, Cin), lambda g: (0, 0)),
                     pl.BlockSpec((Cout, 1), lambda g: (0, 0))]

    kern = functools.partial(
        _temporal_block_kernel, K=K, dilation=dilation, padding=padding,
        L_out=L_out, Bt=Bt, Cin=Cin, Cout=Cout, has_downsample=has_ds,
        residual_from_scratch=not use_bf16_matmul)

    out_packed = pl.pallas_call(
        kern,
        out_shape=jax.ShapeDtypeStruct((n_tiles, Cout, NL), jnp.float32),
        grid_spec=pltpu.PrefetchScalarGridSpec(
            num_scalar_prefetch=0,
            grid=(n_tiles,),
            in_specs=in_specs,
            out_specs=pl.BlockSpec((1, Cout, NL), lambda g: (g, 0, 0)),
            scratch_shapes=[
                pltpu.VMEM((Cin, padding + NL), mm_dtype),    # halo'd packed x
                pltpu.VMEM((Cout, padding + NL), mm_dtype),   # halo'd packed h1
            ]),
        compiler_params=pltpu.CompilerParams(
            dimension_semantics=("parallel",),
            vmem_limit_bytes=48 * 1024 * 1024),
    )(*inputs)

    if Bt == 1:
        out = out_packed                  # already (B, Cout, L_out) — no unpack
    else:
        out = out_packed.reshape(n_tiles, Cout, Bt, L_out)
        out = jnp.transpose(out, (0, 2, 1, 3)).reshape(B, Cout, L_out)
    return out.astype(x.dtype)


# --------------------------------------------------------------------------- #
# Pure-JAX reference (mirrors the PyTorch forward: pad-both-sides conv + chomp)
# --------------------------------------------------------------------------- #
def _reference(x, w1, b1, w2, b2, wd, bd, *, kernel_size, stride, dilation,
               padding):
    def conv1d(inp, w, b, dil, pad):
        y = lax.conv_general_dilated(
            inp, w, window_strides=(stride,), padding=[(pad, pad)],
            rhs_dilation=(dil,), dimension_numbers=("NCH", "OIH", "NCH"))
        return y + b[None, :, None]

    out = conv1d(x, w1, b1, dilation, padding)[:, :, :-padding]
    out = jnp.maximum(out, 0.0)
    out = conv1d(out, w2, b2, dilation, padding)[:, :, :-padding]
    out = jnp.maximum(out, 0.0)
    res = conv1d(x, wd, bd, 1, 0) if wd is not None else x
    return jnp.maximum(out + res, 0.0)


if __name__ == "__main__":
    # Module config: TemporalBlock(n_inputs=4, n_outputs=8, kernel_size=3,
    #                              stride=1, dilation=2, padding=4)
    B, Cin, Cout, L = 2, 4, 8, 16
    K, stride, dilation = 3, 1, 2
    padding = (K - 1) * dilation  # 4

    key = jax.random.PRNGKey(0)
    kx, k1, k2, k3, k4, k5, k6 = jax.random.split(key, 7)

    x = jax.random.normal(kx, (B, Cin, L), jnp.float32)
    # init_weights(): conv weights ~ N(0, 0.01); biases small uniform.
    w1 = 0.01 * jax.random.normal(k1, (Cout, Cin, K), jnp.float32)
    b1 = 0.1 * jax.random.uniform(k2, (Cout,), jnp.float32, -1.0, 1.0)
    w2 = 0.01 * jax.random.normal(k3, (Cout, Cout, K), jnp.float32)
    b2 = 0.1 * jax.random.uniform(k4, (Cout,), jnp.float32, -1.0, 1.0)
    wd = 0.01 * jax.random.normal(k5, (Cout, Cin, 1), jnp.float32)  # downsample
    bd = 0.1 * jax.random.uniform(k6, (Cout,), jnp.float32, -1.0, 1.0)

    ref = _reference(x, w1, b1, w2, b2, wd, bd, kernel_size=K, stride=stride,
                     dilation=dilation, padding=padding)

    # --- f32 path, heuristic tile (Bt=1 here -> 2 grid steps for v7x's 2 TCs)
    out = jax.block_until_ready(temporal_block(
        x, w1, b1, w2, b2, wd, bd, kernel_size=K, stride=stride,
        dilation=dilation, padding=padding))
    assert out.shape == (B, Cout, L)
    assert jnp.allclose(out, ref, atol=1e-5, rtol=1e-5), "f32 mismatch vs ref"

    # --- explicit Bt=2: exercises the lane-packed multi-batch path + unpack -
    out_bt2 = jax.block_until_ready(temporal_block(
        x, w1, b1, w2, b2, wd, bd, kernel_size=K, stride=stride,
        dilation=dilation, padding=padding, batch_tile=2))
    assert jnp.allclose(out_bt2, ref, atol=1e-5, rtol=1e-5), "Bt=2 mismatch"

    # --- bf16 matmul path (skip connection stays f32), loose tolerance ------
    out_bf16 = jax.block_until_ready(temporal_block(
        x, w1, b1, w2, b2, wd, bd, kernel_size=K, stride=stride,
        dilation=dilation, padding=padding, use_bf16_matmul=True))
    assert jnp.allclose(out_bf16, ref, atol=3e-2, rtol=3e-1), "bf16 mismatch"

    # --- identity-residual path (n_inputs == n_outputs, no downsample) ------
    x8 = jax.random.normal(kx, (B, Cout, L), jnp.float32)
    w1b = 0.01 * jax.random.normal(k1, (Cout, Cout, K), jnp.float32)
    ref_id = _reference(x8, w1b, b1, w2, b2, None, None, kernel_size=K,
                        stride=stride, dilation=dilation, padding=padding)
    out_id = jax.block_until_ready(temporal_block(
        x8, w1b, b1, w2, b2, None, None, kernel_size=K, stride=stride,
        dilation=dilation, padding=padding))
    assert jnp.allclose(out_id, ref_id, atol=1e-5, rtol=1e-5), "identity mismatch"

    print("KERNEL_OK")
</pallas_src>

<mosaic_0001>
module attributes {stable_mosaic.version = 11 : i64} {
  func.func @_temporal_block_kernel(%arg0: i32, %arg1: memref<1x4x16xf32, #tpu.memory_space<vmem>>, %arg2: memref<3x8x4xf32, #tpu.memory_space<vmem>>, %arg3: memref<8x1xf32, #tpu.memory_space<vmem>>, %arg4: memref<3x8x8xf32, #tpu.memory_space<vmem>>, %arg5: memref<8x1xf32, #tpu.memory_space<vmem>>, %arg6: memref<8x4xf32, #tpu.memory_space<vmem>>, %arg7: memref<8x1xf32, #tpu.memory_space<vmem>>, %arg8: memref<1x8x16xf32, #tpu.memory_space<vmem>>, %arg9: memref<4x20xf32, #tpu.memory_space<vmem>>, %arg10: memref<8x20xf32, #tpu.memory_space<vmem>>) attributes {dimension_semantics = [#tpu.dimension_semantics<parallel>], iteration_bounds = array<i64: 2>, scalar_prefetch = 0 : i64, scratch_operands = 2 : i64, tpu.core_type = #tpu.core_type<tc>, window_params = [{transform_indices = @transform_0, window_bounds = array<i64: 1, 4, 16>}, {pipeline_mode = #tpu.pipeline_mode<synchronous>, transform_indices = @transform_1, window_bounds = array<i64: 3, 8, 4>}, {pipeline_mode = #tpu.pipeline_mode<synchronous>, transform_indices = @transform_2, window_bounds = array<i64: 8, 1>}, {pipeline_mode = #tpu.pipeline_mode<synchronous>, transform_indices = @transform_3, window_bounds = array<i64: 3, 8, 8>}, {pipeline_mode = #tpu.pipeline_mode<synchronous>, transform_indices = @transform_4, window_bounds = array<i64: 8, 1>}, {pipeline_mode = #tpu.pipeline_mode<synchronous>, transform_indices = @transform_5, window_bounds = array<i64: 8, 4>}, {pipeline_mode = #tpu.pipeline_mode<synchronous>, transform_indices = @transform_6, window_bounds = array<i64: 8, 1>}, {transform_indices = @transform_7, window_bounds = array<i64: 1, 8, 16>}]} {
    %c0 = arith.constant 0 : index
    %c0_0 = arith.constant 0 : index
    %c0_1 = arith.constant 0 : index
    %0 = vector.load %arg1[%c0, %c0_0, %c0_1] : memref<1x4x16xf32, #tpu.memory_space<vmem>>, vector<1x4x16xf32>
    %1 = vector.shape_cast %0 : vector<1x4x16xf32> to vector<4x16xf32>
    %c0_2 = arith.constant 0 : index
    %c4 = arith.constant 4 : index
    %2 = vector.load %arg9[%c0_2, %c4] : memref<4x20xf32, #tpu.memory_space<vmem>>, vector<4x16xf32>
    tpu.vector_store %arg9[%c0_2, %c4], %1 {strides = array<i32>} : memref<4x20xf32, #tpu.memory_space<vmem>>, vector<4x16xf32>,
    %3 = tpu.iota {dimensions = array<i32: 1>} : vector<1x16xi32>
    %c0_3 = arith.constant 0 : index
    %c0_4 = arith.constant 0 : index
    %4 = vector.load %arg9[%c0_3, %c0_4] : memref<4x20xf32, #tpu.memory_space<vmem>>, vector<4x16xf32>
    %c4_i32 = arith.constant 4 : i32
    %5 = vector.broadcast %c4_i32 : i32 to vector<1x16xi32>
    %6 = arith.cmpi sge, %3, %5 : vector<1x16xi32>
    %cst = arith.constant 0.000000e+00 : f32
    %7 = vector.broadcast %cst : f32 to vector<4x16xf32>
    %8 = vector.shape_cast %6 : vector<1x16xi1> to vector<1x16xi1>
    %9 = vector.broadcast %8 : vector<1x16xi1> to vector<4x16xi1>
    %10 = arith.select %9, %4, %7 : vector<4x16xi1>, vector<4x16xf32>
    %c0_5 = arith.constant 0 : index
    %c0_6 = arith.constant 0 : index
    %c0_7 = arith.constant 0 : index
    %11 = vector.load %arg2[%c0_5, %c0_6, %c0_7] : memref<3x8x4xf32, #tpu.memory_space<vmem>>, vector<1x8x4xf32>
    %12 = vector.shape_cast %11 : vector<1x8x4xf32> to vector<8x4xf32>
    %cst_8 = arith.constant dense<0.000000e+00> : vector<8x16xf32>
    %13 = tpu.matmul %12, %10, %cst_8 {dimension_numbers = #tpu.dot_dimension_numbers<[1], [0], [0], [1], [0, 0, 1, 1], [], []>} : vector<8x4xf32>, vector<4x16xf32>, vector<8x16xf32> -> vector<8x16xf32>
    %c0_9 = arith.constant 0 : index
    %c2 = arith.constant 2 : index
    %14 = vector.load %arg9[%c0_9, %c2] : memref<4x20xf32, #tpu.memory_space<vmem>>, vector<4x16xf32>
    %c2_i32 = arith.constant 2 : i32
    %15 = vector.broadcast %c2_i32 : i32 to vector<1x16xi32>
    %16 = arith.cmpi sge, %3, %15 : vector<1x16xi32>
    %cst_10 = arith.constant 0.000000e+00 : f32
    %17 = vector.broadcast %cst_10 : f32 to vector<4x16xf32>
    %18 = vector.shape_cast %16 : vector<1x16xi1> to vector<1x16xi1>
    %19 = vector.broadcast %18 : vector<1x16xi1> to vector<4x16xi1>
    %20 = arith.select %19, %14, %17 : vector<4x16xi1>, vector<4x16xf32>
    %c1 = arith.constant 1 : index
    %c0_11 = arith.constant 0 : index
    %c0_12 = arith.constant 0 : index
    %21 = vector.load %arg2[%c1, %c0_11, %c0_12] : memref<3x8x4xf32, #tpu.memory_space<vmem>>, vector<1x8x4xf32>
    %22 = vector.shape_cast %21 : vector<1x8x4xf32> to vector<8x4xf32>
    %cst_13 = arith.constant dense<0.000000e+00> : vector<8x16xf32>
    %23 = tpu.matmul %22, %20, %cst_13 {dimension_numbers = #tpu.dot_dimension_numbers<[1], [0], [0], [1], [0, 0, 1, 1], [], []>} : vector<8x4xf32>, vector<4x16xf32>, vector<8x16xf32> -> vector<8x16xf32>
    %24 = arith.addf %13, %23 : vector<8x16xf32>
    %c0_14 = arith.constant 0 : index
    %c4_15 = arith.constant 4 : index
    %25 = vector.load %arg9[%c0_14, %c4_15] : memref<4x20xf32, #tpu.memory_space<vmem>>, vector<4x16xf32>
    %c2_16 = arith.constant 2 : index
    %c0_17 = arith.constant 0 : index
    %c0_18 = arith.constant 0 : index
    %26 = vector.load %arg2[%c2_16, %c0_17, %c0_18] : memref<3x8x4xf32, #tpu.memory_space<vmem>>, vector<1x8x4xf32>
    %27 = vector.shape_cast %26 : vector<1x8x4xf32> to vector<8x4xf32>
    %cst_19 = arith.constant dense<0.000000e+00> : vector<8x16xf32>
    %28 = tpu.matmul %27, %25, %cst_19 {dimension_numbers = #tpu.dot_dimension_numbers<[1], [0], [0], [1], [0, 0, 1, 1], [], []>} : vector<8x4xf32>, vector<4x16xf32>, vector<8x16xf32> -> vector<8x16xf32>
    %29 = arith.addf %24, %28 : vector<8x16xf32>
    %c0_20 = arith.constant 0 : index
    %c0_21 = arith.constant 0 : index
    %30 = vector.load %arg3[%c0_20, %c0_21] : memref<8x1xf32, #tpu.memory_space<vmem>>, vector<8x1xf32>
    %31 = vector.broadcast %30 : vector<8x1xf32> to vector<8x16xf32>
    %32 = arith.addf %29, %31 : vector<8x16xf32>
    %cst_22 = arith.constant 0.000000e+00 : f32
    %33 = vector.broadcast %cst_22 : f32 to vector<8x16xf32>
    %34 = arith.maximumf %32, %33 : vector<8x16xf32>
    %c0_23 = arith.constant 0 : index
    %c4_24 = arith.constant 4 : index
    %35 = vector.load %arg10[%c0_23, %c4_24] : memref<8x20xf32, #tpu.memory_space<vmem>>, vector<8x16xf32>
    tpu.vector_store %arg10[%c0_23, %c4_24], %34 {strides = array<i32>} : memref<8x20xf32, #tpu.memory_space<vmem>>, vector<8x16xf32>,
    %c0_25 = arith.constant 0 : index
    %c0_26 = arith.constant 0 : index
    %36 = vector.load %arg10[%c0_25, %c0_26] : memref<8x20xf32, #tpu.memory_space<vmem>>, vector<8x16xf32>
    %c4_i32_27 = arith.constant 4 : i32
    %37 = vector.broadcast %c4_i32_27 : i32 to vector<1x16xi32>
    %38 = arith.cmpi sge, %3, %37 : vector<1x16xi32>
    %cst_28 = arith.constant 0.000000e+00 : f32
    %39 = vector.broadcast %cst_28 : f32 to vector<8x16xf32>
    %40 = vector.shape_cast %38 : vector<1x16xi1> to vector<1x16xi1>
    %41 = vector.broadcast %40 : vector<1x16xi1> to vector<8x16xi1>
    %42 = arith.select %41, %36, %39 : vector<8x16xi1>, vector<8x16xf32>
    %c0_29 = arith.constant 0 : index
    %c0_30 = arith.constant 0 : index
    %c0_31 = arith.constant 0 : index
    %43 = vector.load %arg4[%c0_29, %c0_30, %c0_31] : memref<3x8x8xf32, #tpu.memory_space<vmem>>, vector<1x8x8xf32>
    %44 = vector.shape_cast %43 : vector<1x8x8xf32> to vector<8x8xf32>
    %cst_32 = arith.constant dense<0.000000e+00> : vector<8x16xf32>
    %45 = tpu.matmul %44, %42, %cst_32 {dimension_numbers = #tpu.dot_dimension_numbers<[1], [0], [0], [1], [0, 0, 1, 1], [], []>} : vector<8x8xf32>, vector<8x16xf32>, vector<8x16xf32> -> vector<8x16xf32>
    %c0_33 = arith.constant 0 : index
    %c2_34 = arith.constant 2 : index
    %46 = vector.load %arg10[%c0_33, %c2_34] : memref<8x20xf32, #tpu.memory_space<vmem>>, vector<8x16xf32>
    %c2_i32_35 = arith.constant 2 : i32
    %47 = vector.broadcast %c2_i32_35 : i32 to vector<1x16xi32>
    %48 = arith.cmpi sge, %3, %47 : vector<1x16xi32>
    %cst_36 = arith.constant 0.000000e+00 : f32
    %49 = vector.broadcast %cst_36 : f32 to vector<8x16xf32>
    %50 = vector.shape_cast %48 : vector<1x16xi1> to vector<1x16xi1>
    %51 = vector.broadcast %50 : vector<1x16xi1> to vector<8x16xi1>
    %52 = arith.select %51, %46, %49 : vector<8x16xi1>, vector<8x16xf32>
    %c1_37 = arith.constant 1 : index
    %c0_38 = arith.constant 0 : index
    %c0_39 = arith.constant 0 : index
    %53 = vector.load %arg4[%c1_37, %c0_38, %c0_39] : memref<3x8x8xf32, #tpu.memory_space<vmem>>, vector<1x8x8xf32>
    %54 = vector.shape_cast %53 : vector<1x8x8xf32> to vector<8x8xf32>
    %cst_40 = arith.constant dense<0.000000e+00> : vector<8x16xf32>
    %55 = tpu.matmul %54, %52, %cst_40 {dimension_numbers = #tpu.dot_dimension_numbers<[1], [0], [0], [1], [0, 0, 1, 1], [], []>} : vector<8x8xf32>, vector<8x16xf32>, vector<8x16xf32> -> vector<8x16xf32>
    %56 = arith.addf %45, %55 : vector<8x16xf32>
    %c0_41 = arith.constant 0 : index
    %c4_42 = arith.constant 4 : index
    %57 = vector.load %arg10[%c0_41, %c4_42] : memref<8x20xf32, #tpu.memory_space<vmem>>, vector<8x16xf32>
    %c2_43 = arith.constant 2 : index
    %c0_44 = arith.constant 0 : index
    %c0_45 = arith.constant 0 : index
    %58 = vector.load %arg4[%c2_43, %c0_44, %c0_45] : memref<3x8x8xf32, #tpu.memory_space<vmem>>, vector<1x8x8xf32>
    %59 = vector.shape_cast %58 : vector<1x8x8xf32> to vector<8x8xf32>
    %cst_46 = arith.constant dense<0.000000e+00> : vector<8x16xf32>
    %60 = tpu.matmul %59, %57, %cst_46 {dimension_numbers = #tpu.dot_dimension_numbers<[1], [0], [0], [1], [0, 0, 1, 1], [], []>} : vector<8x8xf32>, vector<8x16xf32>, vector<8x16xf32> -> vector<8x16xf32>
    %61 = arith.addf %56, %60 : vector<8x16xf32>
    %c0_47 = arith.constant 0 : index
    %c0_48 = arith.constant 0 : index
    %62 = vector.load %arg5[%c0_47, %c0_48] : memref<8x1xf32, #tpu.memory_space<vmem>>, vector<8x1xf32>
    %63 = vector.broadcast %62 : vector<8x1xf32> to vector<8x16xf32>
    %64 = arith.addf %61, %63 : vector<8x16xf32>
    %cst_49 = arith.constant 0.000000e+00 : f32
    %65 = vector.broadcast %cst_49 : f32 to vector<8x16xf32>
    %66 = arith.maximumf %64, %65 : vector<8x16xf32>
    %c0_50 = arith.constant 0 : index
    %c4_51 = arith.constant 4 : index
    %67 = vector.load %arg9[%c0_50, %c4_51] : memref<4x20xf32, #tpu.memory_space<vmem>>, vector<4x16xf32>
    %c0_52 = arith.constant 0 : index
    %c0_53 = arith.constant 0 : index
    %68 = vector.load %arg6[%c0_52, %c0_53] : memref<8x4xf32, #tpu.memory_space<vmem>>, vector<8x4xf32>
    %cst_54 = arith.constant dense<0.000000e+00> : vector<8x16xf32>
    %69 = tpu.matmul %68, %67, %cst_54 {dimension_numbers = #tpu.dot_dimension_numbers<[1], [0], [0], [1], [0, 0, 1, 1], [], []>} : vector<8x4xf32>, vector<4x16xf32>, vector<8x16xf32> -> vector<8x16xf32>
    %c0_55 = arith.constant 0 : index
    %c0_56 = arith.constant 0 : index
    %70 = vector.load %arg7[%c0_55, %c0_56] : memref<8x1xf32, #tpu.memory_space<vmem>>, vector<8x1xf32>
    %71 = vector.broadcast %70 : vector<8x1xf32> to vector<8x16xf32>
    %72 = arith.addf %69, %71 : vector<8x16xf32>
    %73 = arith.addf %66, %72 : vector<8x16xf32>
    %cst_57 = arith.constant 0.000000e+00 : f32
    %74 = vector.broadcast %cst_57 : f32 to vector<8x16xf32>
    %75 = arith.maximumf %73, %74 : vector<8x16xf32>
    %c0_58 = arith.constant 0 : index
    %c0_59 = arith.constant 0 : index
    %c0_60 = arith.constant 0 : index
    %76 = vector.load %arg8[%c0_58, %c0_59, %c0_60] : memref<1x8x16xf32, #tpu.memory_space<vmem>>, vector<1x8x16xf32>
    %77 = vector.shape_cast %76 : vector<1x8x16xf32> to vector<8x16xf32>
    %78 = vector.shape_cast %75 : vector<8x16xf32> to vector<1x8x16xf32>
    tpu.vector_store %arg8[%c0_58, %c0_59, %c0_60], %78 {strides = array<i32>} : memref<1x8x16xf32, #tpu.memory_space<vmem>>, vector<1x8x16xf32>,
    return
  }
  func.func @transform_0(%arg0: i32) -> (i32, i32, i32) {
    %c0_i32 = arith.constant 0 : i32
    %c0_i32_0 = arith.constant 0 : i32
    %c0_i32_1 = arith.constant 0 : i32
    return %arg0, %c0_i32, %c0_i32_0 : i32, i32, i32
  }
  func.func @transform_1(%arg0: i32) -> (i32, i32, i32) {
    %c0_i32 = arith.constant 0 : i32
    %c0_i32_0 = arith.constant 0 : i32
    %c0_i32_1 = arith.constant 0 : i32
    %c0_i32_2 = arith.constant 0 : i32
    return %c0_i32, %c0_i32_0, %c0_i32_1 : i32, i32, i32
  }
  func.func @transform_2(%arg0: i32) -> (i32, i32) {
    %c0_i32 = arith.constant 0 : i32
    %c0_i32_0 = arith.constant 0 : i32
    %c0_i32_1 = arith.constant 0 : i32
    return %c0_i32, %c0_i32_0 : i32, i32
  }
  func.func @transform_3(%arg0: i32) -> (i32, i32, i32) {
    %c0_i32 = arith.constant 0 : i32
    %c0_i32_0 = arith.constant 0 : i32
    %c0_i32_1 = arith.constant 0 : i32
    %c0_i32_2 = arith.constant 0 : i32
    return %c0_i32, %c0_i32_0, %c0_i32_1 : i32, i32, i32
  }
  func.func @transform_4(%arg0: i32) -> (i32, i32) {
    %c0_i32 = arith.constant 0 : i32
    %c0_i32_0 = arith.constant 0 : i32
    %c0_i32_1 = arith.constant 0 : i32
    return %c0_i32, %c0_i32_0 : i32, i32
  }
  func.func @transform_5(%arg0: i32) -> (i32, i32) {
    %c0_i32 = arith.constant 0 : i32
    %c0_i32_0 = arith.constant 0 : i32
    %c0_i32_1 = arith.constant 0 : i32
    return %c0_i32, %c0_i32_0 : i32, i32
  }
  func.func @transform_6(%arg0: i32) -> (i32, i32) {
    %c0_i32 = arith.constant 0 : i32
    %c0_i32_0 = arith.constant 0 : i32
    %c0_i32_1 = arith.constant 0 : i32
    return %c0_i32, %c0_i32_0 : i32, i32
  }
  func.func @transform_7(%arg0: i32) -> (i32, i32, i32) {
    %c0_i32 = arith.constant 0 : i32
    %c0_i32_0 = arith.constant 0 : i32
    %c0_i32_1 = arith.constant 0 : i32
    return %arg0, %c0_i32, %c0_i32_0 : i32, i32, i32
  }
}

</mosaic_0001>

<llo_original>
// kernel: tpu_custom_call.1
$region0: #{tpu_custom_call.1}
  #allocation0 [shape = 'u32[]', space=smem, size = 0x4, offset = 0x4, fixed_abs, tag = 'smem constant byte address 0x4 - core index']
  #allocation1 [shape = 'u32[144,128]{1,0:T(1,128)}', space=vmem, size = 0x12000, scoped, tag = 'internal scratch']
  #allocation2 [shape = 'f32[4,20]{1,0:T(4,128)}', space=vmem, size = 0x800, scoped, tag = 'scratch operand']
  #allocation3 [shape = 'f32[8,20]{1,0:T(8,128)}', space=vmem, size = 0x1000, scoped, tag = 'scratch operand']
  %s0 = inlined_call_operand.vmem [shape: f32[2,4,16], index: 0, kind: input, shape index: {}]
  %s1 = inlined_call_operand.vmem [shape: f32[3,8,4], index: 1, kind: input, shape index: {}]
  %s2 = inlined_call_operand.vmem [shape: f32[8,1], index: 2, kind: input, shape index: {}]
  %s3 = inlined_call_operand.vmem [shape: f32[3,8,8], index: 3, kind: input, shape index: {}]
  %s4 = inlined_call_operand.vmem [shape: f32[8,1], index: 4, kind: input, shape index: {}]
  %s5 = inlined_call_operand.vmem [shape: f32[8,4], index: 5, kind: input, shape index: {}]
  %s6 = inlined_call_operand.vmem [shape: f32[8,1], index: 6, kind: input, shape index: {}]
  %s7 = inlined_call_operand.hbm [shape: f32[2,8,16], index: 7, kind: output, shape index: {}]
  %s8 = sld [smem:[#allocation0]]
  $region61: #{tpu_custom_call.1} parent=0
    _
  %s10 = ssub.s32 1, %s8
  %s11 = scalar_select 0, %s10, %s8
  $region1: #{tpu_custom_call.1} parent=0
    #allocation4 [shape = 'u8[8192]{0}', space=vmem, size = 0x2000, scoped, tag = 'output window, operand 0']
    #allocation5 [shape = 's32[2]{0}', space=sflag, size = 0x8, scoped, tag = 'scoped memory for tpu_custom_call.1']
    %12 = vsyncpa [#allocation5], 0
    %s13 = scalar_lea.sflag [#allocation5], 1
    %14 = vsyncpa %s13, 0
    loop: start=0, step=1, limit=4
    $region2: #{tpu_custom_call.1} parent=1 // loop_pre_header
      _
    $region3: #{tpu_custom_call.1} parent=1 // loop_header
      %s16 = sphi 0, %s20
      %p17 = scmp.ge.s32.totalorder %s16, 4
      %s26 = sphi 0, %s28
      %s29 = sphi 0, %s26
      %s30 = sphi 0, %s29
      %s46 = sphi 0, %s30
      %s50 = sphi 0, %s50
      %s52 = sphi 0, %s50
      %s53 = sphi 0, %s52
      %s67 = sphi 0, %s53
      %s71 = sphi 0, %s71
      %s73 = sphi 0, %s71
      %s74 = sphi 0, %s73
      %s88 = sphi 0, %s74
      %s92 = sphi 0, %s92
      %s94 = sphi 0, %s92
      %s95 = sphi 0, %s94
      %s109 = sphi 0, %s95
      %s113 = sphi 0, %s113
      %s115 = sphi 0, %s113
      %s116 = sphi 0, %s115
      %s130 = sphi 0, %s116
      %s134 = sphi 0, %s134
      %s136 = sphi 0, %s134
      %s137 = sphi 0, %s136
      %s151 = sphi 0, %s137
      %s155 = sphi 0, %s155
      %s157 = sphi 0, %s155
      %s158 = sphi 0, %s157
      %s172 = sphi 0, %s158
      %s178 = sphi 0, %s180
      %s181 = sphi 0, %s178
      %s182 = sphi 0, %s181
      %s198 = sphi 0, %s182
    $region4: #{tpu_custom_call.1} parent=1 // loop_header_branch
      %19 = sbr.rel (%p17) target = $region8
    $region5: #{tpu_custom_call.1} parent=1 // loop_body
      %s21 = ssub.s32 %s16, 1
      %s22 = ssub.s32 %s16, 2
      %s23 = sadd.s32 %s16, 1
      %s24 = ssub.s32 %s16, %s23
      %p25 = scmp.eq.s32.totalorder %s24, 0
      %s27 = sadd.s32 %s26, 1
      %s28 = scalar_select %p25, %s26, %s27
      %p31 = pneg %p25
      %p32 = scmp.eq.s32.totalorder %s16, 1
      %p33 = por %p31, %p32
      %p34 = scmp.ne.s32.totalorder %s26, %s29
      %p35 = scmp.eq.s32.totalorder %s16, 0
      %p36 = por %p34, %p35
      %p37 = scmp.ne.s32.totalorder %s26, %s29
      %p38 = scmp.eq.s32.totalorder %s21, 1
      %p39 = por %p37, %p38
      %p40 = scmp.ne.s32.totalorder %s29, %s30
      %p41 = scmp.eq.s32.totalorder %s21, 0
      %p42 = por %p40, %p41
      %p43 = scmp.ne.s32.totalorder %s29, %s30
      %p44 = scmp.eq.s32.totalorder %s22, 1
      %p45 = por %p43, %p44
      %p47 = scmp.ne.s32.totalorder %s30, %s46
      %p48 = scmp.eq.s32.totalorder %s22, 0
      %p49 = por %p47, %p48
      %s51 = sadd.s32 %s50, 1
      %p54 = scmp.eq.s32.totalorder %s16, 1
      %p55 = scmp.ne.s32.totalorder %s50, %s52
      %p56 = scmp.eq.s32.totalorder %s16, 0
      %p57 = por %p55, %p56
      %p58 = scmp.ne.s32.totalorder %s50, %s52
      %p59 = scmp.eq.s32.totalorder %s21, 1
      %p60 = por %p58, %p59
      %p61 = scmp.ne.s32.totalorder %s52, %s53
      %p62 = scmp.eq.s32.totalorder %s21, 0
      %p63 = por %p61, %p62
      %p64 = scmp.ne.s32.totalorder %s52, %s53
      %p65 = scmp.eq.s32.totalorder %s22, 1
      %p66 = por %p64, %p65
      %p68 = scmp.ne.s32.totalorder %s53, %s67
      %p69 = scmp.eq.s32.totalorder %s22, 0
      %p70 = por %p68, %p69
      %s72 = sadd.s32 %s71, 1
      %p75 = scmp.eq.s32.totalorder %s16, 1
      %p76 = scmp.ne.s32.totalorder %s71, %s73
      %p77 = scmp.eq.s32.totalorder %s16, 0
      %p78 = por %p76, %p77
      %p79 = scmp.ne.s32.totalorder %s71, %s73
      %p80 = scmp.eq.s32.totalorder %s21, 1
      %p81 = por %p79, %p80
      %p82 = scmp.ne.s32.totalorder %s73, %s74
      %p83 = scmp.eq.s32.totalorder %s21, 0
      %p84 = por %p82, %p83
      %p85 = scmp.ne.s32.totalorder %s73, %s74
      %p86 = scmp.eq.s32.totalorder %s22, 1
      %p87 = por %p85, %p86
      %p89 = scmp.ne.s32.totalorder %s74, %s88
      %p90 = scmp.eq.s32.totalorder %s22, 0
      %p91 = por %p89, %p90
      %s93 = sadd.s32 %s92, 1
      %p96 = scmp.eq.s32.totalorder %s16, 1
      %p97 = scmp.ne.s32.totalorder %s92, %s94
      %p98 = scmp.eq.s32.totalorder %s16, 0
      %p99 = por %p97, %p98
      %p100 = scmp.ne.s32.totalorder %s92, %s94
      %p101 = scmp.eq.s32.totalorder %s21, 1
      %p102 = por %p100, %p101
      %p103 = scmp.ne.s32.totalorder %s94, %s95
      %p104 = scmp.eq.s32.totalorder %s21, 0
      %p105 = por %p103, %p104
      %p106 = scmp.ne.s32.totalorder %s94, %s95
      %p107 = scmp.eq.s32.totalorder %s22, 1
      %p108 = por %p106, %p107
      %p110 = scmp.ne.s32.totalorder %s95, %s109
      %p111 = scmp.eq.s32.totalorder %s22, 0
      %p112 = por %p110, %p111
      %s114 = sadd.s32 %s113, 1
      %p117 = scmp.eq.s32.totalorder %s16, 1
      %p118 = scmp.ne.s32.totalorder %s113, %s115
      %p119 = scmp.eq.s32.totalorder %s16, 0
      %p120 = por %p118, %p119
      %p121 = scmp.ne.s32.totalorder %s113, %s115
      %p122 = scmp.eq.s32.totalorder %s21, 1
      %p123 = por %p121, %p122
      %p124 = scmp.ne.s32.totalorder %s115, %s116
      %p125 = scmp.eq.s32.totalorder %s21, 0
      %p126 = por %p124, %p125
      %p127 = scmp.ne.s32.totalorder %s115, %s116
      %p128 = scmp.eq.s32.totalorder %s22, 1
      %p129 = por %p127, %p128
      %p131 = scmp.ne.s32.totalorder %s116, %s130
      %p132 = scmp.eq.s32.totalorder %s22, 0
      %p133 = por %p131, %p132
      %s135 = sadd.s32 %s134, 1
      %p138 = scmp.eq.s32.totalorder %s16, 1
      %p139 = scmp.ne.s32.totalorder %s134, %s136
      %p140 = scmp.eq.s32.totalorder %s16, 0
      %p141 = por %p139, %p140
      %p142 = scmp.ne.s32.totalorder %s134, %s136
      %p143 = scmp.eq.s32.totalorder %s21, 1
      %p144 = por %p142, %p143
      %p145 = scmp.ne.s32.totalorder %s136, %s137
      %p146 = scmp.eq.s32.totalorder %s21, 0
      %p147 = por %p145, %p146
      %p148 = scmp.ne.s32.totalorder %s136, %s137
      %p149 = scmp.eq.s32.totalorder %s22, 1
      %p150 = por %p148, %p149
      %p152 = scmp.ne.s32.totalorder %s137, %s151
      %p153 = scmp.eq.s32.totalorder %s22, 0
      %p154 = por %p152, %p153
      %s156 = sadd.s32 %s155, 1
      %p159 = scmp.eq.s32.totalorder %s16, 1
      %p160 = scmp.ne.s32.totalorder %s155, %s157
      %p161 = scmp.eq.s32.totalorder %s16, 0
      %p162 = por %p160, %p161
      %p163 = scmp.ne.s32.totalorder %s155, %s157
      %p164 = scmp.eq.s32.totalorder %s21, 1
      %p165 = por %p163, %p164
      %p166 = scmp.ne.s32.totalorder %s157, %s158
      %p167 = scmp.eq.s32.totalorder %s21, 0
      %p168 = por %p166, %p167
      %p169 = scmp.ne.s32.totalorder %s157, %s158
      %p170 = scmp.eq.s32.totalorder %s22, 1
      %p171 = por %p169, %p170
      %p173 = scmp.ne.s32.totalorder %s158, %s172
      %p174 = scmp.eq.s32.totalorder %s22, 0
      %p175 = por %p173, %p174
      %s176 = ssub.s32 %s16, %s23
      %p177 = scmp.eq.s32.totalorder %s176, 0
      %s179 = sadd.s32 %s178, 1
      %s180 = scalar_select %p177, %s178, %s179
      %p183 = pneg %p177
      %p184 = scmp.eq.s32.totalorder %s16, 1
      %p185 = por %p183, %p184
      %p186 = scmp.ne.s32.totalorder %s178, %s181
      %p187 = scmp.eq.s32.totalorder %s16, 0
      %p188 = por %p186, %p187
      %p189 = scmp.ne.s32.totalorder %s178, %s181
      %p190 = scmp.eq.s32.totalorder %s21, 1
      %p191 = por %p189, %p190
      %p192 = scmp.ne.s32.totalorder %s181, %s182
      %p193 = scmp.eq.s32.totalorder %s21, 0
      %p194 = por %p192, %p193
      %p195 = scmp.ne.s32.totalorder %s181, %s182
      %p196 = scmp.eq.s32.totalorder %s22, 1
      %p197 = por %p195, %p196
      %p199 = scmp.ne.s32.totalorder %s182, %s198
      %p200 = scmp.eq.s32.totalorder %s22, 0
      %p201 = por %p199, %p200
      %p202 = scmp.le.s32.totalorder 1, %s16
      %p203 = scmp.lt.s32.totalorder %s16, 3
      %p204 = pnand %p202, %p203
      %p205 = pneg %p204
      // Predicated region
      $region9: #{tpu_custom_call.1} parent=5 // pred_check
        _
      $region10: #{tpu_custom_call.1} parent=5 // pred_check_branch
        %207 = sbr.rel (%p204) target = $region12
      $region11: #{tpu_custom_call.1} parent=5 // pred_region
        %s208 = ssub.s32 %s16, 1
        // Predicated region
        $region13: #{tpu_custom_call.1} parent=11 // pred_check
          %p209 = pneg %p63
        $region14: #{tpu_custom_call.1} parent=11 // pred_check_branch
          %211 = sbr.rel (%p209) target = $region16
        $region15: #{tpu_custom_call.1} parent=11 // pred_region
          _
        $region16: #{tpu_custom_call.1} parent=11 // pred_fallthru
          _
        // Predicated region
        $region17: #{tpu_custom_call.1} parent=11 // pred_check
          %p212 = pneg %p84
        $region18: #{tpu_custom_call.1} parent=11 // pred_check_branch
          %214 = sbr.rel (%p212) target = $region20
        $region19: #{tpu_custom_call.1} parent=11 // pred_region
          _
        $region20: #{tpu_custom_call.1} parent=11 // pred_fallthru
          _
        // Predicated region
        $region21: #{tpu_custom_call.1} parent=11 // pred_check
          %p215 = pneg %p105
        $region22: #{tpu_custom_call.1} parent=11 // pred_check_branch
          %217 = sbr.rel (%p215) target = $region24
        $region23: #{tpu_custom_call.1} parent=11 // pred_region
          _
        $region24: #{tpu_custom_call.1} parent=11 // pred_fallthru
          _
        // Predicated region
        $region25: #{tpu_custom_call.1} parent=11 // pred_check
          %p218 = pneg %p126
        $region26: #{tpu_custom_call.1} parent=11 // pred_check_branch
          %220 = sbr.rel (%p218) target = $region28
        $region27: #{tpu_custom_call.1} parent=11 // pred_region
          _
        $region28: #{tpu_custom_call.1} parent=11 // pred_fallthru
          _
        // Predicated region
        $region29: #{tpu_custom_call.1} parent=11 // pred_check
          %p221 = pneg %p147
        $region30: #{tpu_custom_call.1} parent=11 // pred_check_branch
          %223 = sbr.rel (%p221) target = $region32
        $region31: #{tpu_custom_call.1} parent=11 // pred_region
          _
        $region32: #{tpu_custom_call.1} parent=11 // pred_fallthru
          _
        // Predicated region
        $region33: #{tpu_custom_call.1} parent=11 // pred_check
          %p224 = pneg %p168
        $region34: #{tpu_custom_call.1} parent=11 // pred_check_branch
          %226 = sbr.rel (%p224) target = $region36
        $region35: #{tpu_custom_call.1} parent=11 // pred_region
          _
        $region36: #{tpu_custom_call.1} parent=11 // pred_fallthru
          _
      $region12: #{tpu_custom_call.1} parent=5 // pred_fallthru
        _
      %p227 = scmp.lt.s32.totalorder %s16, 2
      // Predicated region
      $region37: #{tpu_custom_call.1} parent=5 // pred_check
        %p228 = pneg %p227
      $region38: #{tpu_custom_call.1} parent=5 // pred_check_branch
        %230 = sbr.rel (%p228) target = $region40
      $region39: #{tpu_custom_call.1} parent=5 // pred_region
        // Predicated region
        $region41: #{tpu_custom_call.1} parent=39 // pred_check
          %p231 = pneg %p36
        $region42: #{tpu_custom_call.1} parent=39 // pred_check_branch
          %233 = sbr.rel (%p231) target = $region44
        $region43: #{tpu_custom_call.1} parent=39 // pred_region
          %p234 = scmp.lt.s32.totalorder %s16, 1
          %s235 = scalar_select %p234, %s16, 1
          %s236 = smul.addr %s235, 4
          %s237 = scalar_lea.vmem %s0, %s236
        $region44: #{tpu_custom_call.1} parent=39 // pred_fallthru
          _
      $region40: #{tpu_custom_call.1} parent=5 // pred_fallthru
        _
      %p238 = scmp.le.s32.totalorder 1, %s16
      %p239 = scmp.lt.s32.totalorder %s16, 3
      %p240 = pnand %p238, %p239
      %p241 = pneg %p240
      // Predicated region
      $region45: #{tpu_custom_call.1} parent=5 // pred_check
        _
      $region46: #{tpu_custom_call.1} parent=5 // pred_check_branch
        %243 = sbr.rel (%p240) target = $region48
      $region47: #{tpu_custom_call.1} parent=5 // pred_region
        %s244 = ssub.s32 %s16, 1
        %p245 = scmp.lt.s32.totalorder %s21, 1
        %s246 = scalar_select %p245, %s21, 1
        %s247 = smul.addr %s246, 4
        %s248 = scalar_lea.vmem %s0, %s247
        %p249 = pneg %p42
        %p250 = pneg %p39
        %p251 = pneg %p63
        %p252 = pneg %p60
        %p253 = pneg %p84
        %p254 = pneg %p81
        %p255 = pneg %p105
        %p256 = pneg %p102
        %p257 = pneg %p126
        %p258 = pneg %p123
        %p259 = pneg %p147
        %p260 = pneg %p144
        %p261 = pneg %p168
        %p262 = pneg %p165
        %p263 = pneg %p194
        %p264 = pneg %p191
        %s265 = sand.u32 %s181, 1
        %s266 = scalar_lea.sflag [#allocation5], %s265
        %s267 = sand.u32 %s181, 1
        %s268 = smul.addr %s267, 8
        %s269 = scalar_lea.vmem [#allocation4], %s268
        %p270 = scmp.lt.s32.totalorder %s21, 1
        %s271 = scalar_select %p270, %s21, 1
        %s272 = smul.addr %s271, 4
        %s273 = scalar_lea.vmem %s0, %s272
        %v274 = vld [vmem:[%s273] sm:$0xf]
        %276 = vrot.lane.b32.xlu0 %v274, 4
        %v277 = vpop.permute.xlu0 %276
        %vm279 = vcmask 158752
        %280 = vst.msk [vmem:[#allocation2] sm:$0xf] %vm279, %v277
        %v281 = vlaneseq
        %v282 = vand.u32 %v281, 127
        %v283 = vld [vmem:[#allocation2] sm:$0xf]
        %vm284 = vcmp.ge.s32.totalorder %v282, 4
        %v285 = vsel %vm284, 1, 0
        %vm286 = vcmp.eq.s32.totalorder %v285, 1
        %v287 = vsel %vm286, %v283, 0.0
        %v288 = vld [vmem:[%s1] sm:$0xff]
        %vm289 = vcmp.ge.s32.totalorder %v282, 2
        %v290 = vsel %vm289, 1, 0
        %vm291 = vcmp.eq.s32.totalorder %v290, 1
        %293 = vrot.lane.b32.xlu0 %v283, 126
        %v294 = vpop.permute.xlu0 %293
        %v296 = vsel %vm291, %v294, 0.0
        %s297 = scalar_lea.vmem %s1, 8
        %v298 = vld [vmem:[%s297] sm:$0xff]
        %vm299 = vcmask 31744
        %v301 = vsel %vm299, %v298, 0
        %vm303 = vcmask 1043456
        %v305 = vsel %vm303, %v296, 0
        %307 = vmatprep.subr.mxu0 0.0
        %308 = vmatpush1.msra.mxu0 %v305
        %309 = vmatprep.subr.mxu0 0.0
        %310 = vmatpush1.msra.mxu0 0.0
        %311 = vmatprep.subr.mxu0 0.0
        %312 = vmatpush1.msra.mxu0 0.0
        %313 = vmatprep.subr.mxu0 0.0
        %314 = vmatpush1.msra.mxu0 0.0
        %315 = vmatprep.subr.mxu0 0.0
        %316 = vmatpush1.msra.mxu0 0.0
        %317 = vmatprep.subr.mxu0 0.0
        %318 = vmatpush1.msra.mxu0 0.0
        %319 = vmatprep.subr.mxu0 0.0
        %320 = vmatpush1.msra.mxu0 0.0
        %321 = vmatprep.subr.mxu0 0.0
        %322 = vmatpush1.msra.mxu0 0.0
        %323 = vmatprep.subr.mxu0 0.0
        %324 = vmatpush1.msra.mxu0 0.0
        %325 = vmatprep.subr.mxu0 0.0
        %326 = vmatpush1.msra.mxu0 0.0
        %327 = vmatprep.subr.mxu0 0.0
        %328 = vmatpush1.msra.mxu0 0.0
        %329 = vmatprep.subr.mxu0 0.0
        %330 = vmatpush1.msra.mxu0 0.0
        %331 = vmatprep.subr.mxu0 0.0
        %332 = vmatpush1.msra.mxu0 0.0
        %333 = vmatprep.subr.mxu0 0.0
        %334 = vmatpush1.msra.mxu0 0.0
        %335 = vmatprep.subr.mxu0 0.0
        %336 = vmatpush1.msra.mxu0 0.0
        %337 = vmatprep.subr.mxu0 0.0
        %338 = vmatpush1.msra.mxu0 0.0
        %339 = vmatprep.subr.mxu0 0.0
        %340 = vmatpush1.msra.mxu0 0.0
        %341 = vmatprep.subr.mxu0 0.0
        %342 = vmatpush1.msra.mxu0 0.0
        %343 = vmatprep.subr.mxu0 0.0
        %344 = vmatpush1.msra.mxu0 0.0
        %345 = vmatprep.subr.mxu0 0.0
        %346 = vmatpush1.msra.mxu0 0.0
        %347 = vmatprep.subr.mxu0 0.0
        %348 = vmatpush1.msra.mxu0 0.0
        %349 = vmatprep.subr.mxu0 0.0
        %350 = vmatpush1.msra.mxu0 0.0
        %351 = vmatprep.subr.mxu0 0.0
        %352 = vmatpush1.msra.mxu0 0.0
        %353 = vmatprep.subr.mxu0 0.0
        %354 = vmatpush1.msra.mxu0 0.0
        %355 = vmatprep.subr.mxu0 0.0
        %356 = vmatpush1.msra.mxu0 0.0
        %357 = vmatprep.subr.mxu0 0.0
        %358 = vmatpush1.msra.mxu0 0.0
        %359 = vmatprep.subr.mxu0 0.0
        %360 = vmatpush1.msra.mxu0 0.0
        %361 = vmatprep.subr.mxu0 0.0
        %362 = vmatpush1.msra.mxu0 0.0
        %363 = vmatprep.subr.mxu0 0.0
        %364 = vmatpush1.msra.mxu0 0.0
        %365 = vmatprep.subr.mxu0 0.0
        %366 = vmatpush1.msra.mxu0 0.0
        %367 = vmatprep.subr.mxu0 0.0
        %368 = vmatpush1.msra.mxu0 0.0
        %369 = vmatprep.subr.mxu0 0.0
        %370 = vmatpush1.msra.mxu0 0.0
        %371 = vmatprep.mubr.f32.mxu0 0.0
        %372 = vmatmul.mubr.f32.gmra.mrb[0].mxu0 %v301
        %v373 = vpop.f32.mrb[0].mxu0
        %v374 = vadd.f32 0.0, %v373
        %v375 = vpop.f32.mrb[0].mxu0
        %376 = vdwg.mxu0
        %v378 = vsel %vm299, %v288, 0
        %v381 = vsel %vm303, %v287, 0
        %383 = vmatprep.subr.mxu0 0.0
        %384 = vmatpush1.msra.mxu0 %v381
        %385 = vmatprep.subr.mxu0 0.0
        %386 = vmatpush1.msra.mxu0 0.0
        %387 = vmatprep.subr.mxu0 0.0
        %388 = vmatpush1.msra.mxu0 0.0
        %389 = vmatprep.subr.mxu0 0.0
        %390 = vmatpush1.msra.mxu0 0.0
        %391 = vmatprep.subr.mxu0 0.0
        %392 = vmatpush1.msra.mxu0 0.0
        %393 = vmatprep.subr.mxu0 0.0
        %394 = vmatpush1.msra.mxu0 0.0
        %395 = vmatprep.subr.mxu0 0.0
        %396 = vmatpush1.msra.mxu0 0.0
        %397 = vmatprep.subr.mxu0 0.0
        %398 = vmatpush1.msra.mxu0 0.0
        %399 = vmatprep.subr.mxu0 0.0
        %400 = vmatpush1.msra.mxu0 0.0
        %401 = vmatprep.subr.mxu0 0.0
        %402 = vmatpush1.msra.mxu0 0.0
        %403 = vmatprep.subr.mxu0 0.0
        %404 = vmatpush1.msra.mxu0 0.0
        %405 = vmatprep.subr.mxu0 0.0
        %406 = vmatpush1.msra.mxu0 0.0
        %407 = vmatprep.subr.mxu0 0.0
        %408 = vmatpush1.msra.mxu0 0.0
        %409 = vmatprep.subr.mxu0 0.0
        %410 = vmatpush1.msra.mxu0 0.0
        %411 = vmatprep.subr.mxu0 0.0
        %412 = vmatpush1.msra.mxu0 0.0
        %413 = vmatprep.subr.mxu0 0.0
        %414 = vmatpush1.msra.mxu0 0.0
        %415 = vmatprep.subr.mxu0 0.0
        %416 = vmatpush1.msra.mxu0 0.0
        %417 = vmatprep.subr.mxu0 0.0
        %418 = vmatpush1.msra.mxu0 0.0
        %419 = vmatprep.subr.mxu0 0.0
        %420 = vmatpush1.msra.mxu0 0.0
        %421 = vmatprep.subr.mxu0 0.0
        %422 = vmatpush1.msra.mxu0 0.0
        %423 = vmatprep.subr.mxu0 0.0
        %424 = vmatpush1.msra.mxu0 0.0
        %425 = vmatprep.subr.mxu0 0.0
        %426 = vmatpush1.msra.mxu0 0.0
        %427 = vmatprep.subr.mxu0 0.0
        %428 = vmatpush1.msra.mxu0 0.0
        %429 = vmatprep.subr.mxu0 0.0
        %430 = vmatpush1.msra.mxu0 0.0
        %431 = vmatprep.subr.mxu0 0.0
        %432 = vmatpush1.msra.mxu0 0.0
        %433 = vmatprep.subr.mxu0 0.0
        %434 = vmatpush1.msra.mxu0 0.0
        %435 = vmatprep.subr.mxu0 0.0
        %436 = vmatpush1.msra.mxu0 0.0
        %437 = vmatprep.subr.mxu0 0.0
        %438 = vmatpush1.msra.mxu0 0.0
        %439 = vmatprep.subr.mxu0 0.0
        %440 = vmatpush1.msra.mxu0 0.0
        %441 = vmatprep.subr.mxu0 0.0
        %442 = vmatpush1.msra.mxu0 0.0
        %443 = vmatprep.subr.mxu0 0.0
        %444 = vmatpush1.msra.mxu0 0.0
        %445 = vmatprep.subr.mxu0 0.0
        %446 = vmatpush1.msra.mxu0 0.0
        %447 = vmatprep.mubr.f32.mxu0 0.0
        %448 = vmatmul.mubr.f32.gmra.mrb[0].mxu0 %v378
        %v449 = vpop.f32.mrb[0].mxu0
        %v450 = vadd.f32 %v374, %v449
        %v451 = vpop.f32.mrb[0].mxu0
        %452 = vdwg.mxu0
        %s453 = scalar_lea.vmem %s1, 16
        %v454 = vld [vmem:[%s453] sm:$0xff]
        %455 = vrot.lane.b32.xlu0 %v283, 124
        %v456 = vpop.permute.xlu0 %455
        %v458 = vsel %vm299, %v454, 0
        %v460 = vsel %vm303, %v456, 0
        %462 = vmatprep.subr.mxu0 0.0
        %463 = vmatpush1.msra.mxu0 %v460
        %464 = vmatprep.subr.mxu0 0.0
        %465 = vmatpush1.msra.mxu0 0.0
        %466 = vmatprep.subr.mxu0 0.0
        %467 = vmatpush1.msra.mxu0 0.0
        %468 = vmatprep.subr.mxu0 0.0
        %469 = vmatpush1.msra.mxu0 0.0
        %470 = vmatprep.subr.mxu0 0.0
        %471 = vmatpush1.msra.mxu0 0.0
        %472 = vmatprep.subr.mxu0 0.0
        %473 = vmatpush1.msra.mxu0 0.0
        %474 = vmatprep.subr.mxu0 0.0
        %475 = vmatpush1.msra.mxu0 0.0
        %476 = vmatprep.subr.mxu0 0.0
        %477 = vmatpush1.msra.mxu0 0.0
        %478 = vmatprep.subr.mxu0 0.0
        %479 = vmatpush1.msra.mxu0 0.0
        %480 = vmatprep.subr.mxu0 0.0
        %481 = vmatpush1.msra.mxu0 0.0
        %482 = vmatprep.subr.mxu0 0.0
        %483 = vmatpush1.msra.mxu0 0.0
        %484 = vmatprep.subr.mxu0 0.0
        %485 = vmatpush1.msra.mxu0 0.0
        %486 = vmatprep.subr.mxu0 0.0
        %487 = vmatpush1.msra.mxu0 0.0
        %488 = vmatprep.subr.mxu0 0.0
        %489 = vmatpush1.msra.mxu0 0.0
        %490 = vmatprep.subr.mxu0 0.0
        %491 = vmatpush1.msra.mxu0 0.0
        %492 = vmatprep.subr.mxu0 0.0
        %493 = vmatpush1.msra.mxu0 0.0
        %494 = vmatprep.subr.mxu0 0.0
        %495 = vmatpush1.msra.mxu0 0.0
        %496 = vmatprep.subr.mxu0 0.0
        %497 = vmatpush1.msra.mxu0 0.0
        %498 = vmatprep.subr.mxu0 0.0
        %499 = vmatpush1.msra.mxu0 0.0
        %500 = vmatprep.subr.mxu0 0.0
        %501 = vmatpush1.msra.mxu0 0.0
        %502 = vmatprep.subr.mxu0 0.0
        %503 = vmatpush1.msra.mxu0 0.0
        %504 = vmatprep.subr.mxu0 0.0
        %505 = vmatpush1.msra.mxu0 0.0
        %506 = vmatprep.subr.mxu0 0.0
        %507 = vmatpush1.msra.mxu0 0.0
        %508 = vmatprep.subr.mxu0 0.0
        %509 = vmatpush1.msra.mxu0 0.0
        %510 = vmatprep.subr.mxu0 0.0
        %511 = vmatpush1.msra.mxu0 0.0
        %512 = vmatprep.subr.mxu0 0.0
        %513 = vmatpush1.msra.mxu0 0.0
        %514 = vmatprep.subr.mxu0 0.0
        %515 = vmatpush1.msra.mxu0 0.0
        %516 = vmatprep.subr.mxu0 0.0
        %517 = vmatpush1.msra.mxu0 0.0
        %518 = vmatprep.subr.mxu0 0.0
        %519 = vmatpush1.msra.mxu0 0.0
        %520 = vmatprep.subr.mxu0 0.0
        %521 = vmatpush1.msra.mxu0 0.0
        %522 = vmatprep.subr.mxu0 0.0
        %523 = vmatpush1.msra.mxu0 0.0
        %524 = vmatprep.subr.mxu0 0.0
        %525 = vmatpush1.msra.mxu0 0.0
        %526 = vmatprep.mubr.f32.mxu0 0.0
        %527 = vmatmul.mubr.f32.gmra.mrb[0].mxu0 %v458
        %v528 = vpop.f32.mrb[0].mxu0
        %v529 = vadd.f32 0.0, %v528
        %v530 = vpop.f32.mrb[0].mxu0
        %531 = vdwg.mxu0
        %v532 = vadd.f32 %v450, %v529
        %v533 = vld [vmem:[%s2] sm:$0xff]
        %535 = vset.pattern.permute.xlu0 0
        %536 = vperm.xlu0 %535, %v533
        %v537 = vpop.permute.xlu0 %536
        %v539 = vadd.f32 %v532, %v537
        %v540 = vmax.f32 %v539, 0.0
        %542 = vrot.lane.b32.xlu0 %v540, 4
        %v543 = vpop.permute.xlu0 %542
        %vm545 = vcmask 162848
        %546 = vst.msk [vmem:[#allocation3] sm:$0xff] %vm545, %v543
        %v547 = vld [vmem:[#allocation3] sm:$0xff]
        %v548 = vsel %vm286, %v547, 0.0
        %v549 = vld [vmem:[%s3] sm:$0xff]
        %551 = vrot.lane.b32.xlu0 %v547, 126
        %v552 = vpop.permute.xlu0 %551
        %v554 = vsel %vm291, %v552, 0.0
        %s555 = scalar_lea.vmem %s3, 8
        %v556 = vld [vmem:[%s555] sm:$0xff]
        %vm557 = vcmask 64512
        %v559 = vsel %vm557, %v556, 0
        %561 = vmatprep.subr.mxu0 0.0
        %562 = vmatpush1.msra.mxu0 %v554
        %563 = vmatprep.subr.mxu0 0.0
        %564 = vmatpush1.msra.mxu0 0.0
        %565 = vmatprep.subr.mxu0 0.0
        %566 = vmatpush1.msra.mxu0 0.0
        %567 = vmatprep.subr.mxu0 0.0
        %568 = vmatpush1.msra.mxu0 0.0
        %569 = vmatprep.subr.mxu0 0.0
        %570 = vmatpush1.msra.mxu0 0.0
        %571 = vmatprep.subr.mxu0 0.0
        %572 = vmatpush1.msra.mxu0 0.0
        %573 = vmatprep.subr.mxu0 0.0
        %574 = vmatpush1.msra.mxu0 0.0
        %575 = vmatprep.subr.mxu0 0.0
        %576 = vmatpush1.msra.mxu0 0.0
        %577 = vmatprep.subr.mxu0 0.0
        %578 = vmatpush1.msra.mxu0 0.0
        %579 = vmatprep.subr.mxu0 0.0
        %580 = vmatpush1.msra.mxu0 0.0
        %581 = vmatprep.subr.mxu0 0.0
        %582 = vmatpush1.msra.mxu0 0.0
        %583 = vmatprep.subr.mxu0 0.0
        %584 = vmatpush1.msra.mxu0 0.0
        %585 = vmatprep.subr.mxu0 0.0
        %586 = vmatpush1.msra.mxu0 0.0
        %587 = vmatprep.subr.mxu0 0.0
        %588 = vmatpush1.msra.mxu0 0.0
        %589 = vmatprep.subr.mxu0 0.0
        %590 = vmatpush1.msra.mxu0 0.0
        %591 = vmatprep.subr.mxu0 0.0
        %592 = vmatpush1.msra.mxu0 0.0
        %593 = vmatprep.subr.mxu0 0.0
        %594 = vmatpush1.msra.mxu0 0.0
        %595 = vmatprep.subr.mxu0 0.0
        %596 = vmatpush1.msra.mxu0 0.0
        %597 = vmatprep.subr.mxu0 0.0
        %598 = vmatpush1.msra.mxu0 0.0
        %599 = vmatprep.subr.mxu0 0.0
        %600 = vmatpush1.msra.mxu0 0.0
        %601 = vmatprep.subr.mxu0 0.0
        %602 = vmatpush1.msra.mxu0 0.0
        %603 = vmatprep.subr.mxu0 0.0
        %604 = vmatpush1.msra.mxu0 0.0
        %605 = vmatprep.subr.mxu0 0.0
        %606 = vmatpush1.msra.mxu0 0.0
        %607 = vmatprep.subr.mxu0 0.0
        %608 = vmatpush1.msra.mxu0 0.0
        %609 = vmatprep.subr.mxu0 0.0
        %610 = vmatpush1.msra.mxu0 0.0
        %611 = vmatprep.subr.mxu0 0.0
        %612 = vmatpush1.msra.mxu0 0.0
        %613 = vmatprep.subr.mxu0 0.0
        %614 = vmatpush1.msra.mxu0 0.0
        %615 = vmatprep.subr.mxu0 0.0
        %616 = vmatpush1.msra.mxu0 0.0
        %617 = vmatprep.subr.mxu0 0.0
        %618 = vmatpush1.msra.mxu0 0.0
        %619 = vmatprep.subr.mxu0 0.0
        %620 = vmatpush1.msra.mxu0 0.0
        %621 = vmatprep.subr.mxu0 0.0
        %622 = vmatpush1.msra.mxu0 0.0
        %623 = vmatprep.subr.mxu0 0.0
        %624 = vmatpush1.msra.mxu0 0.0
        %625 = vmatprep.mubr.f32.mxu0 0.0
        %626 = vmatmul.mubr.f32.gmra.mrb[0].mxu0 %v559
        %v627 = vpop.f32.mrb[0].mxu0
        %v628 = vadd.f32 0.0, %v627
        %v629 = vpop.f32.mrb[0].mxu0
        %630 = vdwg.mxu0
        %v632 = vsel %vm557, %v549, 0
        %634 = vmatprep.subr.mxu0 0.0
        %635 = vmatpush1.msra.mxu0 %v548
        %636 = vmatprep.subr.mxu0 0.0
        %637 = vmatpush1.msra.mxu0 0.0
        %638 = vmatprep.subr.mxu0 0.0
        %639 = vmatpush1.msra.mxu0 0.0
        %640 = vmatprep.subr.mxu0 0.0
        %641 = vmatpush1.msra.mxu0 0.0
        %642 = vmatprep.subr.mxu0 0.0
        %643 = vmatpush1.msra.mxu0 0.0
        %644 = vmatprep.subr.mxu0 0.0
        %645 = vmatpush1.msra.mxu0 0.0
        %646 = vmatprep.subr.mxu0 0.0
        %647 = vmatpush1.msra.mxu0 0.0
        %648 = vmatprep.subr.mxu0 0.0
        %649 = vmatpush1.msra.mxu0 0.0
        %650 = vmatprep.subr.mxu0 0.0
        %651 = vmatpush1.msra.mxu0 0.0
        %652 = vmatprep.subr.mxu0 0.0
        %653 = vmatpush1.msra.mxu0 0.0
        %654 = vmatprep.subr.mxu0 0.0
        %655 = vmatpush1.msra.mxu0 0.0
        %656 = vmatprep.subr.mxu0 0.0
        %657 = vmatpush1.msra.mxu0 0.0
        %658 = vmatprep.subr.mxu0 0.0
        %659 = vmatpush1.msra.mxu0 0.0
        %660 = vmatprep.subr.mxu0 0.0
        %661 = vmatpush1.msra.mxu0 0.0
        %662 = vmatprep.subr.mxu0 0.0
        %663 = vmatpush1.msra.mxu0 0.0
        %664 = vmatprep.subr.mxu0 0.0
        %665 = vmatpush1.msra.mxu0 0.0
        %666 = vmatprep.subr.mxu0 0.0
        %667 = vmatpush1.msra.mxu0 0.0
        %668 = vmatprep.subr.mxu0 0.0
        %669 = vmatpush1.msra.mxu0 0.0
        %670 = vmatprep.subr.mxu0 0.0
        %671 = vmatpush1.msra.mxu0 0.0
        %672 = vmatprep.subr.mxu0 0.0
        %673 = vmatpush1.msra.mxu0 0.0
        %674 = vmatprep.subr.mxu0 0.0
        %675 = vmatpush1.msra.mxu0 0.0
        %676 = vmatprep.subr.mxu0 0.0
        %677 = vmatpush1.msra.mxu0 0.0
        %678 = vmatprep.subr.mxu0 0.0
        %679 = vmatpush1.msra.mxu0 0.0
        %680 = vmatprep.subr.mxu0 0.0
        %681 = vmatpush1.msra.mxu0 0.0
        %682 = vmatprep.subr.mxu0 0.0
        %683 = vmatpush1.msra.mxu0 0.0
        %684 = vmatprep.subr.mxu0 0.0
        %685 = vmatpush1.msra.mxu0 0.0
        %686 = vmatprep.subr.mxu0 0.0
        %687 = vmatpush1.msra.mxu0 0.0
        %688 = vmatprep.subr.mxu0 0.0
        %689 = vmatpush1.msra.mxu0 0.0
        %690 = vmatprep.subr.mxu0 0.0
        %691 = vmatpush1.msra.mxu0 0.0
        %692 = vmatprep.subr.mxu0 0.0
        %693 = vmatpush1.msra.mxu0 0.0
        %694 = vmatprep.subr.mxu0 0.0
        %695 = vmatpush1.msra.mxu0 0.0
        %696 = vmatprep.subr.mxu0 0.0
        %697 = vmatpush1.msra.mxu0 0.0
        %698 = vmatprep.mubr.f32.mxu0 0.0
        %699 = vmatmul.mubr.f32.gmra.mrb[0].mxu0 %v632
        %v700 = vpop.f32.mrb[0].mxu0
        %v701 = vadd.f32 %v628, %v700
        %v702 = vpop.f32.mrb[0].mxu0
        %703 = vdwg.mxu0
        %s704 = scalar_lea.vmem %s3, 16
        %v705 = vld [vmem:[%s704] sm:$0xff]
        %706 = vrot.lane.b32.xlu0 %v547, 124
        %v707 = vpop.permute.xlu0 %706
        %v710 = vsel %vm557, %v705, 0
        %712 = vmatprep.subr.mxu0 0.0
        %713 = vmatpush1.msra.mxu0 %v707
        %714 = vmatprep.subr.mxu0 0.0
        %715 = vmatpush1.msra.mxu0 0.0
        %716 = vmatprep.subr.mxu0 0.0
        %717 = vmatpush1.msra.mxu0 0.0
        %718 = vmatprep.subr.mxu0 0.0
        %719 = vmatpush1.msra.mxu0 0.0
        %720 = vmatprep.subr.mxu0 0.0
        %721 = vmatpush1.msra.mxu0 0.0
        %722 = vmatprep.subr.mxu0 0.0
        %723 = vmatpush1.msra.mxu0 0.0
        %724 = vmatprep.subr.mxu0 0.0
        %725 = vmatpush1.msra.mxu0 0.0
        %726 = vmatprep.subr.mxu0 0.0
        %727 = vmatpush1.msra.mxu0 0.0
        %728 = vmatprep.subr.mxu0 0.0
        %729 = vmatpush1.msra.mxu0 0.0
        %730 = vmatprep.subr.mxu0 0.0
        %731 = vmatpush1.msra.mxu0 0.0
        %732 = vmatprep.subr.mxu0 0.0
        %733 = vmatpush1.msra.mxu0 0.0
        %734 = vmatprep.subr.mxu0 0.0
        %735 = vmatpush1.msra.mxu0 0.0
        %736 = vmatprep.subr.mxu0 0.0
        %737 = vmatpush1.msra.mxu0 0.0
        %738 = vmatprep.subr.mxu0 0.0
        %739 = vmatpush1.msra.mxu0 0.0
        %740 = vmatprep.subr.mxu0 0.0
        %741 = vmatpush1.msra.mxu0 0.0
        %742 = vmatprep.subr.mxu0 0.0
        %743 = vmatpush1.msra.mxu0 0.0
        %744 = vmatprep.subr.mxu0 0.0
        %745 = vmatpush1.msra.mxu0 0.0
        %746 = vmatprep.subr.mxu0 0.0
        %747 = vmatpush1.msra.mxu0 0.0
        %748 = vmatprep.subr.mxu0 0.0
        %749 = vmatpush1.msra.mxu0 0.0
        %750 = vmatprep.subr.mxu0 0.0
        %751 = vmatpush1.msra.mxu0 0.0
        %752 = vmatprep.subr.mxu0 0.0
        %753 = vmatpush1.msra.mxu0 0.0
        %754 = vmatprep.subr.mxu0 0.0
        %755 = vmatpush1.msra.mxu0 0.0
        %756 = vmatprep.subr.mxu0 0.0
        %757 = vmatpush1.msra.mxu0 0.0
        %758 = vmatprep.subr.mxu0 0.0
        %759 = vmatpush1.msra.mxu0 0.0
        %760 = vmatprep.subr.mxu0 0.0
        %761 = vmatpush1.msra.mxu0 0.0
        %762 = vmatprep.subr.mxu0 0.0
        %763 = vmatpush1.msra.mxu0 0.0
        %764 = vmatprep.subr.mxu0 0.0
        %765 = vmatpush1.msra.mxu0 0.0
        %766 = vmatprep.subr.mxu0 0.0
        %767 = vmatpush1.msra.mxu0 0.0
        %768 = vmatprep.subr.mxu0 0.0
        %769 = vmatpush1.msra.mxu0 0.0
        %770 = vmatprep.subr.mxu0 0.0
        %771 = vmatpush1.msra.mxu0 0.0
        %772 = vmatprep.subr.mxu0 0.0
        %773 = vmatpush1.msra.mxu0 0.0
        %774 = vmatprep.subr.mxu0 0.0
        %775 = vmatpush1.msra.mxu0 0.0
        %776 = vmatprep.mubr.f32.mxu0 0.0
        %777 = vmatmul.mubr.f32.gmra.mrb[0].mxu0 %v710
        %v778 = vpop.f32.mrb[0].mxu0
        %v779 = vadd.f32 0.0, %v778
        %v780 = vpop.f32.mrb[0].mxu0
        %781 = vdwg.mxu0
        %v782 = vadd.f32 %v701, %v779
        %v783 = vld [vmem:[%s4] sm:$0xff]
        %785 = vset.pattern.permute.xlu0 0
        %786 = vperm.xlu0 %785, %v783
        %v787 = vpop.permute.xlu0 %786
        %v789 = vadd.f32 %v782, %v787
        %v790 = vmax.f32 %v789, 0.0
        %v791 = vld [vmem:[#allocation2] sm:$0xf]
        %v792 = vld [vmem:[%s5] sm:$0xff]
        %v793 = vld [vmem:[%s6] sm:$0xff]
        %795 = vset.pattern.permute.xlu0 0
        %796 = vperm.xlu0 %795, %v793
        %v797 = vpop.permute.xlu0 %796
        %800 = vrot.lane.b32.xlu0 %v791, 124
        %v801 = vpop.permute.xlu0 %800
        %v803 = vsel %vm299, %v792, 0
        %v805 = vsel %vm303, %v801, 0
        %807 = vmatprep.subr.mxu0 0.0
        %808 = vmatpush1.msra.mxu0 %v805
        %809 = vmatprep.subr.mxu0 0.0
        %810 = vmatpush1.msra.mxu0 0.0
        %811 = vmatprep.subr.mxu0 0.0
        %812 = vmatpush1.msra.mxu0 0.0
        %813 = vmatprep.subr.mxu0 0.0
        %814 = vmatpush1.msra.mxu0 0.0
        %815 = vmatprep.subr.mxu0 0.0
        %816 = vmatpush1.msra.mxu0 0.0
        %817 = vmatprep.subr.mxu0 0.0
        %818 = vmatpush1.msra.mxu0 0.0
        %819 = vmatprep.subr.mxu0 0.0
        %820 = vmatpush1.msra.mxu0 0.0
        %821 = vmatprep.subr.mxu0 0.0
        %822 = vmatpush1.msra.mxu0 0.0
        %823 = vmatprep.subr.mxu0 0.0
        %824 = vmatpush1.msra.mxu0 0.0
        %825 = vmatprep.subr.mxu0 0.0
        %826 = vmatpush1.msra.mxu0 0.0
        %827 = vmatprep.subr.mxu0 0.0
        %828 = vmatpush1.msra.mxu0 0.0
        %829 = vmatprep.subr.mxu0 0.0
        %830 = vmatpush1.msra.mxu0 0.0
        %831 = vmatprep.subr.mxu0 0.0
        %832 = vmatpush1.msra.mxu0 0.0
        %833 = vmatprep.subr.mxu0 0.0
        %834 = vmatpush1.msra.mxu0 0.0
        %835 = vmatprep.subr.mxu0 0.0
        %836 = vmatpush1.msra.mxu0 0.0
        %837 = vmatprep.subr.mxu0 0.0
        %838 = vmatpush1.msra.mxu0 0.0
        %839 = vmatprep.subr.mxu0 0.0
        %840 = vmatpush1.msra.mxu0 0.0
        %841 = vmatprep.subr.mxu0 0.0
        %842 = vmatpush1.msra.mxu0 0.0
        %843 = vmatprep.subr.mxu0 0.0
        %844 = vmatpush1.msra.mxu0 0.0
        %845 = vmatprep.subr.mxu0 0.0
        %846 = vmatpush1.msra.mxu0 0.0
        %847 = vmatprep.subr.mxu0 0.0
        %848 = vmatpush1.msra.mxu0 0.0
        %849 = vmatprep.subr.mxu0 0.0
        %850 = vmatpush1.msra.mxu0 0.0
        %851 = vmatprep.subr.mxu0 0.0
        %852 = vmatpush1.msra.mxu0 0.0
        %853 = vmatprep.subr.mxu0 0.0
        %854 = vmatpush1.msra.mxu0 0.0
        %855 = vmatprep.subr.mxu0 0.0
        %856 = vmatpush1.msra.mxu0 0.0
        %857 = vmatprep.subr.mxu0 0.0
        %858 = vmatpush1.msra.mxu0 0.0
        %859 = vmatprep.subr.mxu0 0.0
        %860 = vmatpush1.msra.mxu0 0.0
        %861 = vmatprep.subr.mxu0 0.0
        %862 = vmatpush1.msra.mxu0 0.0
        %863 = vmatprep.subr.mxu0 0.0
        %864 = vmatpush1.msra.mxu0 0.0
        %865 = vmatprep.subr.mxu0 0.0
        %866 = vmatpush1.msra.mxu0 0.0
        %867 = vmatprep.subr.mxu0 0.0
        %868 = vmatpush1.msra.mxu0 0.0
        %869 = vmatprep.subr.mxu0 0.0
        %870 = vmatpush1.msra.mxu0 0.0
        %871 = vmatprep.mubr.f32.mxu0 0.0
        %872 = vmatmul.mubr.f32.gmra.mrb[0].mxu0 %v803
        %v873 = vpop.f32.mrb[0].mxu0
        %v874 = vadd.f32 %v797, %v873
        %v875 = vpop.f32.mrb[0].mxu0
        %876 = vdwg.mxu0
        %v877 = vadd.f32 %v790, %v874
        %v878 = vmax.f32 %v877, 0.0
        %vm879 = vcmask 130048
        %880 = vst.msk [vmem:[%s269] sm:$0xff] %vm879, %v878
        %s881 = sand.u32 %s181, 1
        %s882 = scalar_lea.sflag [#allocation5], %s881
        %s883 = sand.u32 %s181, 1
        %s884 = smul.addr %s883, 8
        %s885 = scalar_lea.vmem [#allocation4], %s884
        // Predicated region
        $region49: #{tpu_custom_call.1} parent=47 // pred_check
          %p886 = pneg %p191
        $region50: #{tpu_custom_call.1} parent=47 // pred_check_branch
          %888 = sbr.rel (%p886) target = $region52
        $region51: #{tpu_custom_call.1} parent=47 // pred_region
          %s890 = ssub.s32 128, 128
          %891 = vsyncadd %s882, %s890
          %s892 = smul.addr %s21, 128
          %s893 = scalar_lea.hbm %s7, %s892
          %s895 = sshll.u32 %s885, 4
          %s896 = int_to_ptr.vmem [resolvable:$true] %s895
          %898 = dma.vmem_to_hbm [thread:$0]  %s896, 128, %s893, %s882
        $region52: #{tpu_custom_call.1} parent=47 // pred_fallthru
          _
      $region48: #{tpu_custom_call.1} parent=5 // pred_fallthru
        _
      %p899 = scmp.le.s32.totalorder 2, %s16
      // Predicated region
      $region53: #{tpu_custom_call.1} parent=5 // pred_check
        %p900 = pneg %p899
      $region54: #{tpu_custom_call.1} parent=5 // pred_check_branch
        %902 = sbr.rel (%p900) target = $region56
      $region55: #{tpu_custom_call.1} parent=5 // pred_region
        %s903 = ssub.s32 %s16, 2
        // Predicated region
        $region57: #{tpu_custom_call.1} parent=55 // pred_check
          %p904 = pneg %p197
        $region58: #{tpu_custom_call.1} parent=55 // pred_check_branch
          %906 = sbr.rel (%p904) target = $region60
        $region59: #{tpu_custom_call.1} parent=55 // pred_region
          %s907 = sand.u32 %s182, 1
          %s908 = scalar_lea.sflag [#allocation5], %s907
          %s909 = sand.u32 %s182, 1
          %s910 = smul.addr %s909, 8
          %s911 = scalar_lea.vmem [#allocation4], %s910
          %912 = dma.done %s908, 128
        $region60: #{tpu_custom_call.1} parent=55 // pred_fallthru
          _
      $region56: #{tpu_custom_call.1} parent=5 // pred_fallthru
        _
    $region6: #{tpu_custom_call.1} parent=1 // loop_footer
      %s20 = sadd.s32 1, %s16
    $region7: #{tpu_custom_call.1} parent=1 // loop_footer_branch
      %15 = sbr.rel target = $region3
    $region8: #{tpu_custom_call.1} parent=1 // loop_exit
      _
    %913 = vsyncpa [#allocation5], 1
    %s914 = scalar_lea.sflag [#allocation5], 1
    %915 = vsyncpa %s914, 1

</llo_original>
